<compile_context>
chip_gen: v7x
topology: tpu7x:2x2x1
jax: 0.10.0
libtpu: 0.0.40
codegen_flags: <defaults>
</compile_context>

<pallas_src>
import math
from functools import partial

import jax
import jax.numpy as jnp
from jax.experimental import pallas as pl
from jax.experimental.pallas import tpu as pltpu


# --------------------------------------------------------------------------- #
# helpers
# --------------------------------------------------------------------------- #
def _tpu_vmem_budget():
    """Return (usable scoped-VMEM bytes, has_big_vmem). Conservative fallback if query fails."""
    try:
        cap = int(pltpu.get_tpu_info().vmem_capacity_bytes)
    except Exception:
        cap = 64 * 1024 * 1024                 # assume v7x-sized VMEM when unknown
    return (cap * 3) // 5, cap >= 96 * 1024 * 1024


def _pick_tile(dim, max_tile, quantum):
    """Largest divisor of `dim` that is <= max_tile and a multiple of `quantum`.
    Falls back to the full dimension (block == array extent is always legal)."""
    if dim <= max_tile:
        return dim
    start = max_tile - (max_tile % quantum)
    for t in range(start, quantum - 1, -quantum):
        if dim % t == 0:
            return t
    return dim


def _vmem_limit(in_block_bytes, out_block_bytes, scratch_bytes, temp_bytes, cap):
    """Pallas double-buffers every input and output block; add scratch + temporaries."""
    est = 2 * (in_block_bytes + out_block_bytes) + scratch_bytes + temp_bytes
    est = int(est * 1.25) + (8 << 20)          # headroom for compiler-internal scratch
    return int(max(32 << 20, min(est, cap)))


# --------------------------------------------------------------------------- #
# Kernel 1: K / V projections (shared across batch), reduction-tiled over d_llm.
#           K is emitted transposed (HE, S) = the layout kernel 2 slices per head.
# --------------------------------------------------------------------------- #
def _kv_proj_kernel(src_ref, val_ref, wk_ref, bk_ref, wv_ref, bv_ref,
                    kt_ref, v_ref, k_acc, v_acc):
    r = pl.program_id(0)

    @pl.when(r == 0)
    def _init():
        k_acc[...] = jnp.zeros_like(k_acc)
        v_acc[...] = jnp.zeros_like(v_acc)

    # bf16 x bf16 -> f32 accumulate (MXU fast path on v5e/v6e/v7x)
    k_acc[...] += jnp.dot(src_ref[...], wk_ref[...], preferred_element_type=jnp.float32)
    v_acc[...] += jnp.dot(val_ref[...], wv_ref[...], preferred_element_type=jnp.float32)

    @pl.when(r == pl.num_programs(0) - 1)
    def _finalize():
        k = k_acc[...] + bk_ref[...]                  # (S, HE) f32
        v = v_acc[...] + bv_ref[...]
        kt_ref[...] = k.T.astype(kt_ref.dtype)        # (HE, S): VMEM-local shuffle, no HBM pass
        v_ref[...] = v.astype(v_ref.dtype)            # (S, HE): lane-dense in HE


# --------------------------------------------------------------------------- #
# Kernel 2: fused Q-projection + per-head attention + fused output projection.
# --------------------------------------------------------------------------- #
def _attn_kernel(tgt_ref, wq_ref, bq_ref, kt_ref, v_ref, wo_ref, bo_ref, o_ref,
                 *, n_heads, d_keys, scale, compute_dtype):
    x = tgt_ref[0]                                                    # (tile_l, d_model) bf16

    # Fused Q projection for all heads; 1/sqrt(E) folded in once (not per-head on scores).
    q_all = jnp.dot(x, wq_ref[...], preferred_element_type=jnp.float32)
    q_all = ((q_all + bq_ref[...]) * scale).astype(compute_dtype)     # (tile_l, HE)

    head_outs = []
    for h in range(n_heads):                                          # H is small & static
        lo = h * d_keys
        q_h = q_all[:, lo:lo + d_keys]                                # (tile_l, E) lane view
        k_h = kt_ref[pl.ds(lo, d_keys), :]                            # (E, S) sublane-slice view
        s = jnp.dot(q_h, k_h, preferred_element_type=jnp.float32)     # (tile_l, S) lane-dense
        s = s - jnp.max(s, axis=-1, keepdims=True)
        p = jnp.exp(s)
        p = p * pl.reciprocal(jnp.sum(p, axis=-1, keepdims=True), approx=True)
        v_h = v_ref[:, pl.ds(lo, d_keys)]                             # (S, E)
        head_outs.append(
            jnp.dot(p.astype(compute_dtype), v_h,
                    preferred_element_type=jnp.float32).astype(compute_dtype))

    o_all = jnp.concatenate(head_outs, axis=-1)                       # (tile_l, HE)
    out = jnp.dot(o_all, wo_ref[...], preferred_element_type=jnp.float32) + bo_ref[...]
    o_ref[0] = out.astype(o_ref.dtype)


# --------------------------------------------------------------------------- #
# Wrapper
# --------------------------------------------------------------------------- #
def reprogramming_layer_forward(target_embedding, source_embedding, value_embedding,
                                wq, bq, wk, bk, wv, bv, wo, bo,
                                *, n_heads, compute_dtype=jnp.bfloat16,
                                max_tile_l=None, max_tile_dllm=None):
    B, L, d_model = target_embedding.shape
    S, d_llm = source_embedding.shape
    HE = wq.shape[1]
    E = HE // n_heads
    d_out = wo.shape[1]
    out_dtype = target_embedding.dtype
    csize = jnp.dtype(compute_dtype).itemsize

    vmem_cap, big_vmem = _tpu_vmem_budget()
    if max_tile_l is None:
        max_tile_l = 1024 if big_vmem else 256
    if max_tile_dllm is None:
        max_tile_dllm = 1024 if big_vmem else 256

    # bf16 operands feed the MXU fast path and halve VMEM/HBM footprint of every block.
    tgt = target_embedding.astype(compute_dtype)
    src = source_embedding.astype(compute_dtype)
    val = value_embedding.astype(compute_dtype)
    wq_c, wk_c, wv_c, wo_c = (w.astype(compute_dtype) for w in (wq, wk, wv, wo))
    bq2 = bq.reshape(1, HE).astype(jnp.float32)
    bk2 = bk.reshape(1, HE).astype(jnp.float32)
    bv2 = bv.reshape(1, HE).astype(jnp.float32)
    bo2 = bo.reshape(1, d_out).astype(jnp.float32)

    # ---- Kernel 1: K / V projections (once, shared across batch) -------------
    tile_k = _pick_tile(d_llm, max_tile_dllm, 128)
    kv_in = (2 * S * tile_k * csize + 2 * tile_k * HE * csize + 2 * HE * 4)
    kv_out = 2 * S * HE * csize
    kv_scratch = 2 * S * HE * 4
    kv_temp = 4 * S * HE * 4
    kt_kv, v_kv = pl.pallas_call(
        _kv_proj_kernel,
        out_shape=(jax.ShapeDtypeStruct((HE, S), compute_dtype),
                   jax.ShapeDtypeStruct((S, HE), compute_dtype)),
        grid_spec=pltpu.PrefetchScalarGridSpec(
            num_scalar_prefetch=0,
            grid=(d_llm // tile_k,),
            in_specs=[
                pl.BlockSpec((S, tile_k), lambda r: (0, r)),
                pl.BlockSpec((S, tile_k), lambda r: (0, r)),
                pl.BlockSpec((tile_k, HE), lambda r: (r, 0)),
                pl.BlockSpec((1, HE), lambda r: (0, 0)),
                pl.BlockSpec((tile_k, HE), lambda r: (r, 0)),
                pl.BlockSpec((1, HE), lambda r: (0, 0)),
            ],
            out_specs=(pl.BlockSpec((HE, S), lambda r: (0, 0)),
                       pl.BlockSpec((S, HE), lambda r: (0, 0))),
            scratch_shapes=[pltpu.VMEM((S, HE), jnp.float32),
                            pltpu.VMEM((S, HE), jnp.float32)],
        ),
        compiler_params=pltpu.CompilerParams(
            dimension_semantics=("arbitrary",),          # reduction over d_llm
            vmem_limit_bytes=_vmem_limit(kv_in, kv_out, kv_scratch, kv_temp, vmem_cap),
        ),
    )(src, val, wk_c, bk2, wv_c, bv2)

    # ---- Kernel 2: fused attention -------------------------------------------
    tile_l = _pick_tile(L, max_tile_l, 8)
    scale = 1.0 / math.sqrt(E)
    at_in = (tile_l * d_model * csize
             + d_model * HE * csize + HE * 4
             + 2 * S * HE * csize
             + HE * d_out * csize + d_out * 4)
    at_out = tile_l * d_out * jnp.dtype(out_dtype).itemsize
    at_temp = 4 * tile_l * (HE + S + d_out + d_model) * 4

    out = pl.pallas_call(
        partial(_attn_kernel, n_heads=n_heads, d_keys=E, scale=scale,
                compute_dtype=compute_dtype),
        out_shape=jax.ShapeDtypeStruct((B, L, d_out), out_dtype),
        grid_spec=pltpu.PrefetchScalarGridSpec(
            num_scalar_prefetch=0,
            grid=(B, L // tile_l),
            in_specs=[
                pl.BlockSpec((1, tile_l, d_model), lambda b, l: (b, l, 0)),
                pl.BlockSpec((d_model, HE), lambda b, l: (0, 0)),
                pl.BlockSpec((1, HE), lambda b, l: (0, 0)),
                pl.BlockSpec((HE, S), lambda b, l: (0, 0)),
                pl.BlockSpec((S, HE), lambda b, l: (0, 0)),
                pl.BlockSpec((HE, d_out), lambda b, l: (0, 0)),
                pl.BlockSpec((1, d_out), lambda b, l: (0, 0)),
            ],
            out_specs=pl.BlockSpec((1, tile_l, d_out), lambda b, l: (b, l, 0)),
        ),
        compiler_params=pltpu.CompilerParams(
            dimension_semantics=("parallel", "parallel"),
            vmem_limit_bytes=_vmem_limit(at_in, at_out, 0, at_temp, vmem_cap),
        ),
    )(tgt, wq_c, bq2, kt_kv, v_kv, wo_c, bo2)

    return out


# --------------------------------------------------------------------------- #
# Test
# --------------------------------------------------------------------------- #
if __name__ == "__main__":
    key = jax.random.PRNGKey(0)
    B, L, S = 2, 8, 16
    d_model, n_heads, d_llm = 32, 4, 128
    d_keys = d_model // n_heads          # 8
    HE = d_keys * n_heads                # 32
    d_out = 64                           # fixed by the module's out_projection

    keys = jax.random.split(key, 8)
    tgt = jax.random.normal(keys[0], (B, L, d_model), jnp.float32)
    src = jax.random.normal(keys[1], (S, d_llm), jnp.float32)
    val = jax.random.normal(keys[2], (S, d_llm), jnp.float32)

    def init_linear(k, fan_in, fan_out):
        kw, kb = jax.random.split(k)
        bound = 1.0 / math.sqrt(fan_in)
        w = jax.random.uniform(kw, (fan_in, fan_out), jnp.float32, -bound, bound)
        b = jax.random.uniform(kb, (fan_out,), jnp.float32, -bound, bound)
        return w, b

    wq, bq = init_linear(keys[3], d_model, HE)
    wk, bk = init_linear(keys[4], d_llm, HE)
    wv, bv = init_linear(keys[5], d_llm, HE)
    wo, bo = init_linear(keys[6], HE, d_out)

    out = reprogramming_layer_forward(tgt, src, val,
                                      wq, bq, wk, bk, wv, bv, wo, bo,
                                      n_heads=n_heads)
    jax.block_until_ready(out)

    # Pure-JAX f32 reference (same semantics as the PyTorch forward, eval mode).
    Q = (tgt @ wq + bq).reshape(B, L, n_heads, d_keys)
    K = (src @ wk + bk).reshape(S, n_heads, d_keys)
    V = (val @ wv + bv).reshape(S, n_heads, d_keys)
    scores = jnp.einsum('blhe,she->bhls', Q, K) / math.sqrt(d_keys)
    A = jax.nn.softmax(scores, axis=-1)
    ref = jnp.einsum('bhls,she->blhe', A, V).reshape(B, L, HE) @ wo + bo

    assert out.shape == (B, L, d_out)
    # bf16 MXU operands -> loosened tolerance vs the f32 reference (~1e-2 relative).
    assert jnp.allclose(out.astype(jnp.float32), ref, atol=3e-2, rtol=3e-2), \
        "mismatch vs reference"
    print("KERNEL_OK")
</pallas_src>

<mosaic_0001>
module attributes {stable_mosaic.version = 11 : i64} {
  func.func @_kv_proj_kernel(%arg0: i32, %arg1: memref<16x128xbf16, #tpu.memory_space<vmem>>, %arg2: memref<16x128xbf16, #tpu.memory_space<vmem>>, %arg3: memref<128x32xbf16, #tpu.memory_space<vmem>>, %arg4: memref<1x32xf32, #tpu.memory_space<vmem>>, %arg5: memref<128x32xbf16, #tpu.memory_space<vmem>>, %arg6: memref<1x32xf32, #tpu.memory_space<vmem>>, %arg7: memref<32x16xbf16, #tpu.memory_space<vmem>>, %arg8: memref<16x32xbf16, #tpu.memory_space<vmem>>, %arg9: memref<16x32xf32, #tpu.memory_space<vmem>>, %arg10: memref<16x32xf32, #tpu.memory_space<vmem>>) attributes {dimension_semantics = [#tpu.dimension_semantics<arbitrary>], iteration_bounds = array<i64: 1>, scalar_prefetch = 0 : i64, scratch_operands = 2 : i64, tpu.core_type = #tpu.core_type<tc>, window_params = [{transform_indices = @transform_0, window_bounds = array<i64: 16, 128>}, {transform_indices = @transform_1, window_bounds = array<i64: 16, 128>}, {transform_indices = @transform_2, window_bounds = array<i64: 128, 32>}, {pipeline_mode = #tpu.pipeline_mode<synchronous>, transform_indices = @transform_3, window_bounds = array<i64: 1, 32>}, {transform_indices = @transform_4, window_bounds = array<i64: 128, 32>}, {pipeline_mode = #tpu.pipeline_mode<synchronous>, transform_indices = @transform_5, window_bounds = array<i64: 1, 32>}, {pipeline_mode = #tpu.pipeline_mode<synchronous>, transform_indices = @transform_6, window_bounds = array<i64: 32, 16>}, {pipeline_mode = #tpu.pipeline_mode<synchronous>, transform_indices = @transform_7, window_bounds = array<i64: 16, 32>}]} {
    %c0_i32 = arith.constant 0 : i32
    %0 = arith.cmpi eq, %arg0, %c0_i32 : i32
    %1 = arith.extui %0 : i1 to i32
    %c0_i32_0 = arith.constant 0 : i32
    %2 = arith.cmpi ne, %1, %c0_i32_0 : i32
    scf.if %2 {
      %cst_19 = arith.constant 0.000000e+00 : f32
      %18 = vector.broadcast %cst_19 : f32 to vector<16x32xf32>
      %c0_20 = arith.constant 0 : index
      %c0_21 = arith.constant 0 : index
      %19 = vector.load %arg9[%c0_20, %c0_21] : memref<16x32xf32, #tpu.memory_space<vmem>>, vector<16x32xf32>
      tpu.vector_store %arg9[%c0_20, %c0_21], %18 {strides = array<i32>} : memref<16x32xf32, #tpu.memory_space<vmem>>, vector<16x32xf32>,
      %cst_22 = arith.constant 0.000000e+00 : f32
      %20 = vector.broadcast %cst_22 : f32 to vector<16x32xf32>
      %c0_23 = arith.constant 0 : index
      %c0_24 = arith.constant 0 : index
      %21 = vector.load %arg10[%c0_23, %c0_24] : memref<16x32xf32, #tpu.memory_space<vmem>>, vector<16x32xf32>
      tpu.vector_store %arg10[%c0_23, %c0_24], %20 {strides = array<i32>} : memref<16x32xf32, #tpu.memory_space<vmem>>, vector<16x32xf32>,
    } else {
    }
    %c0 = arith.constant 0 : index
    %c0_1 = arith.constant 0 : index
    %3 = vector.load %arg9[%c0, %c0_1] : memref<16x32xf32, #tpu.memory_space<vmem>>, vector<16x32xf32>
    %c0_2 = arith.constant 0 : index
    %c0_3 = arith.constant 0 : index
    %4 = vector.load %arg1[%c0_2, %c0_3] : memref<16x128xbf16, #tpu.memory_space<vmem>>, vector<16x128xbf16>
    %c0_4 = arith.constant 0 : index
    %c0_5 = arith.constant 0 : index
    %5 = vector.load %arg3[%c0_4, %c0_5] : memref<128x32xbf16, #tpu.memory_space<vmem>>, vector<128x32xbf16>
    %cst = arith.constant dense<0.000000e+00> : vector<16x32xf32>
    %6 = tpu.matmul %4, %5, %cst {dimension_numbers = #tpu.dot_dimension_numbers<[1], [0], [0], [1], [0, 0, 1, 1], [], []>} : vector<16x128xbf16>, vector<128x32xbf16>, vector<16x32xf32> -> vector<16x32xf32>
    %7 = arith.addf %3, %6 : vector<16x32xf32>
    %c0_6 = arith.constant 0 : index
    %c0_7 = arith.constant 0 : index
    %8 = vector.load %arg9[%c0_6, %c0_7] : memref<16x32xf32, #tpu.memory_space<vmem>>, vector<16x32xf32>
    tpu.vector_store %arg9[%c0_6, %c0_7], %7 {strides = array<i32>} : memref<16x32xf32, #tpu.memory_space<vmem>>, vector<16x32xf32>,
    %c0_8 = arith.constant 0 : index
    %c0_9 = arith.constant 0 : index
    %9 = vector.load %arg10[%c0_8, %c0_9] : memref<16x32xf32, #tpu.memory_space<vmem>>, vector<16x32xf32>
    %c0_10 = arith.constant 0 : index
    %c0_11 = arith.constant 0 : index
    %10 = vector.load %arg2[%c0_10, %c0_11] : memref<16x128xbf16, #tpu.memory_space<vmem>>, vector<16x128xbf16>
    %c0_12 = arith.constant 0 : index
    %c0_13 = arith.constant 0 : index
    %11 = vector.load %arg5[%c0_12, %c0_13] : memref<128x32xbf16, #tpu.memory_space<vmem>>, vector<128x32xbf16>
    %cst_14 = arith.constant dense<0.000000e+00> : vector<16x32xf32>
    %12 = tpu.matmul %10, %11, %cst_14 {dimension_numbers = #tpu.dot_dimension_numbers<[1], [0], [0], [1], [0, 0, 1, 1], [], []>} : vector<16x128xbf16>, vector<128x32xbf16>, vector<16x32xf32> -> vector<16x32xf32>
    %13 = arith.addf %9, %12 : vector<16x32xf32>
    %c0_15 = arith.constant 0 : index
    %c0_16 = arith.constant 0 : index
    %14 = vector.load %arg10[%c0_15, %c0_16] : memref<16x32xf32, #tpu.memory_space<vmem>>, vector<16x32xf32>
    tpu.vector_store %arg10[%c0_15, %c0_16], %13 {strides = array<i32>} : memref<16x32xf32, #tpu.memory_space<vmem>>, vector<16x32xf32>,
    %c0_i32_17 = arith.constant 0 : i32
    %15 = arith.cmpi eq, %arg0, %c0_i32_17 : i32
    %16 = arith.extui %15 : i1 to i32
    %c0_i32_18 = arith.constant 0 : i32
    %17 = arith.cmpi ne, %16, %c0_i32_18 : i32
    scf.if %17 {
      %c0_19 = arith.constant 0 : index
      %c0_20 = arith.constant 0 : index
      %18 = vector.load %arg9[%c0_19, %c0_20] : memref<16x32xf32, #tpu.memory_space<vmem>>, vector<16x32xf32>
      %c0_21 = arith.constant 0 : index
      %c0_22 = arith.constant 0 : index
      %19 = vector.load %arg4[%c0_21, %c0_22] : memref<1x32xf32, #tpu.memory_space<vmem>>, vector<1x32xf32>
      %20 = vector.broadcast %19 : vector<1x32xf32> to vector<16x32xf32>
      %21 = arith.addf %18, %20 : vector<16x32xf32>
      %c0_23 = arith.constant 0 : index
      %c0_24 = arith.constant 0 : index
      %22 = vector.load %arg10[%c0_23, %c0_24] : memref<16x32xf32, #tpu.memory_space<vmem>>, vector<16x32xf32>
      %c0_25 = arith.constant 0 : index
      %c0_26 = arith.constant 0 : index
      %23 = vector.load %arg6[%c0_25, %c0_26] : memref<1x32xf32, #tpu.memory_space<vmem>>, vector<1x32xf32>
      %24 = vector.broadcast %23 : vector<1x32xf32> to vector<16x32xf32>
      %25 = arith.addf %22, %24 : vector<16x32xf32>
      %26 = tpu.transpose %21, [1, 0] : vector<16x32xf32> -> vector<32x16xf32>
      %27 = arith.truncf %26 : vector<32x16xf32> to vector<32x16xbf16>
      %c0_27 = arith.constant 0 : index
      %c0_28 = arith.constant 0 : index
      %28 = vector.load %arg7[%c0_27, %c0_28] : memref<32x16xbf16, #tpu.memory_space<vmem>>, vector<32x16xbf16>
      tpu.vector_store %arg7[%c0_27, %c0_28], %27 {strides = array<i32>} : memref<32x16xbf16, #tpu.memory_space<vmem>>, vector<32x16xbf16>,
      %29 = arith.truncf %25 : vector<16x32xf32> to vector<16x32xbf16>
      %c0_29 = arith.constant 0 : index
      %c0_30 = arith.constant 0 : index
      %30 = vector.load %arg8[%c0_29, %c0_30] : memref<16x32xbf16, #tpu.memory_space<vmem>>, vector<16x32xbf16>
      tpu.vector_store %arg8[%c0_29, %c0_30], %29 {strides = array<i32>} : memref<16x32xbf16, #tpu.memory_space<vmem>>, vector<16x32xbf16>,
    } else {
    }
    return
  }
  func.func @transform_0(%arg0: i32) -> (i32, i32) {
    %c0_i32 = arith.constant 0 : i32
    %c0_i32_0 = arith.constant 0 : i32
    return %c0_i32, %arg0 : i32, i32
  }
  func.func @transform_1(%arg0: i32) -> (i32, i32) {
    %c0_i32 = arith.constant 0 : i32
    %c0_i32_0 = arith.constant 0 : i32
    return %c0_i32, %arg0 : i32, i32
  }
  func.func @transform_2(%arg0: i32) -> (i32, i32) {
    %c0_i32 = arith.constant 0 : i32
    %c0_i32_0 = arith.constant 0 : i32
    return %arg0, %c0_i32 : i32, i32
  }
  func.func @transform_3(%arg0: i32) -> (i32, i32) {
    %c0_i32 = arith.constant 0 : i32
    %c0_i32_0 = arith.constant 0 : i32
    %c0_i32_1 = arith.constant 0 : i32
    return %c0_i32, %c0_i32_0 : i32, i32
  }
  func.func @transform_4(%arg0: i32) -> (i32, i32) {
    %c0_i32 = arith.constant 0 : i32
    %c0_i32_0 = arith.constant 0 : i32
    return %arg0, %c0_i32 : i32, i32
  }
  func.func @transform_5(%arg0: i32) -> (i32, i32) {
    %c0_i32 = arith.constant 0 : i32
    %c0_i32_0 = arith.constant 0 : i32
    %c0_i32_1 = arith.constant 0 : i32
    return %c0_i32, %c0_i32_0 : i32, i32
  }
  func.func @transform_6(%arg0: i32) -> (i32, i32) {
    %c0_i32 = arith.constant 0 : i32
    %c0_i32_0 = arith.constant 0 : i32
    %c0_i32_1 = arith.constant 0 : i32
    return %c0_i32, %c0_i32_0 : i32, i32
  }
  func.func @transform_7(%arg0: i32) -> (i32, i32) {
    %c0_i32 = arith.constant 0 : i32
    %c0_i32_0 = arith.constant 0 : i32
    %c0_i32_1 = arith.constant 0 : i32
    return %c0_i32, %c0_i32_0 : i32, i32
  }
}

</mosaic_0001>

<llo_original>
// kernel: tpu_custom_call.1
$region0: #{tpu_custom_call.1}
  #allocation0 [shape = 'u32[]', space=smem, size = 0x4, offset = 0x4, fixed_abs, tag = 'smem constant byte address 0x4 - core index']
  #allocation1 [shape = 'u32[144,128]{1,0:T(1,128)}', space=vmem, size = 0x12000, scoped, tag = 'internal scratch']
  #allocation2 [shape = 'f32[16,32]{1,0:T(8,128)}', space=vmem, size = 0x2000, scoped, tag = 'scratch operand']
  #allocation3 [shape = 'f32[16,32]{1,0:T(8,128)}', space=vmem, size = 0x2000, scoped, tag = 'scratch operand']
  %s0 = inlined_call_operand.vmem [shape: bf16[16,128], index: 0, kind: input, shape index: {}]
  %s1 = inlined_call_operand.vmem [shape: bf16[16,128], index: 1, kind: input, shape index: {}]
  %s2 = inlined_call_operand.vmem [shape: bf16[128,32], index: 2, kind: input, shape index: {}]
  %s3 = inlined_call_operand.vmem [shape: f32[1,32], index: 3, kind: input, shape index: {}]
  %s4 = inlined_call_operand.vmem [shape: bf16[128,32], index: 4, kind: input, shape index: {}]
  %s5 = inlined_call_operand.vmem [shape: f32[1,32], index: 5, kind: input, shape index: {}]
  %s6 = inlined_call_operand.vmem [shape: bf16[32,16], index: 6, kind: output, shape index: {0}]
  %s7 = inlined_call_operand.hbm [shape: bf16[16,32], index: 7, kind: output, shape index: {1}]
  %8 = xla_tuple %s6, %s7
  %s9 = sld [smem:[#allocation0]]
  $region50: #{tpu_custom_call.1} parent=0
    _
  %s11 = ssub.s32 1, %s9
  %s12 = scalar_select 0, %s11, %s9
  $region1: #{tpu_custom_call.1} parent=0
    #allocation4 [shape = 'u8[4096]{0}', space=vmem, size = 0x1000, scoped, tag = 'output window, operand 1, single buffered']
    #allocation5 [shape = 's32[1]{0}', space=sflag, size = 0x4, scoped, tag = 'scoped memory for tpu_custom_call.1']
    %13 = vsyncpa [#allocation5], 0
    // Predicated region
    $region2: #{tpu_custom_call.1} parent=1 // pred_check
      _
    $region3: #{tpu_custom_call.1} parent=1 // pred_check_branch
      %15 = sbr.rel (0) target = $region5
    $region4: #{tpu_custom_call.1} parent=1 // pred_region
      _
    $region5: #{tpu_custom_call.1} parent=1 // pred_fallthru
      _
    // Predicated region
    $region6: #{tpu_custom_call.1} parent=1 // pred_check
      _
    $region7: #{tpu_custom_call.1} parent=1 // pred_check_branch
      %17 = sbr.rel (0) target = $region9
    $region8: #{tpu_custom_call.1} parent=1 // pred_region
      _
    $region9: #{tpu_custom_call.1} parent=1 // pred_fallthru
      _
    // Predicated region
    $region10: #{tpu_custom_call.1} parent=1 // pred_check
      _
    $region11: #{tpu_custom_call.1} parent=1 // pred_check_branch
      %19 = sbr.rel (0) target = $region13
    $region12: #{tpu_custom_call.1} parent=1 // pred_region
      _
    $region13: #{tpu_custom_call.1} parent=1 // pred_fallthru
      _
    // Predicated region
    $region14: #{tpu_custom_call.1} parent=1 // pred_check
      _
    $region15: #{tpu_custom_call.1} parent=1 // pred_check_branch
      %21 = sbr.rel (0) target = $region17
    $region16: #{tpu_custom_call.1} parent=1 // pred_region
      _
    $region17: #{tpu_custom_call.1} parent=1 // pred_fallthru
      _
    // Predicated region
    $region18: #{tpu_custom_call.1} parent=1 // pred_check
      _
    $region19: #{tpu_custom_call.1} parent=1 // pred_check_branch
      %23 = sbr.rel (0) target = $region21
    $region20: #{tpu_custom_call.1} parent=1 // pred_region
      _
    $region21: #{tpu_custom_call.1} parent=1 // pred_fallthru
      _
    // Predicated region
    $region22: #{tpu_custom_call.1} parent=1 // pred_check
      _
    $region23: #{tpu_custom_call.1} parent=1 // pred_check_branch
      %25 = sbr.rel (0) target = $region25
    $region24: #{tpu_custom_call.1} parent=1 // pred_region
      _
    $region25: #{tpu_custom_call.1} parent=1 // pred_fallthru
      _
    %p27 = scmp.eq.s32.totalorder 0, 0
    // Predicated region
    $region26: #{tpu_custom_call.1} parent=1 // pred_check
      %p28 = pneg %p27
    $region27: #{tpu_custom_call.1} parent=1 // pred_check_branch
      %30 = sbr.rel (%p28) target = $region29
    $region28: #{tpu_custom_call.1} parent=1 // pred_region
      %vm31 = vcmask 261120
      %32 = vst.msk [vmem:[#allocation2] sm:$0xff] %vm31, 0.0
      %33 = vst.msk [vmem:[#allocation2 + $0x8] sm:$0xff] %vm31, 0.0
      %34 = vst.msk [vmem:[#allocation3] sm:$0xff] %vm31, 0.0
      %35 = vst.msk [vmem:[#allocation3 + $0x8] sm:$0xff] %vm31, 0.0
    $region29: #{tpu_custom_call.1} parent=1 // pred_fallthru
      _
    %v36 = vld [vmem:[#allocation2] sm:$0xff]
    %v37 = vld [vmem:[#allocation2 + $0x8] sm:$0xff]
    %v38 = vld [vmem:[%s0] sm:$0xf]
    %v39 = vld [vmem:[%s0 + $0x4] sm:$0xf]
    %v40 = vld [vmem:[%s2] sm:$0xf]
    %v41 = vld [vmem:[%s2 + $0x4] sm:$0xf]
    %v42 = vld [vmem:[%s2 + $0x8] sm:$0xf]
    %v43 = vld [vmem:[%s2 + $0xc] sm:$0xf]
    %v44 = vld [vmem:[%s2 + $0x10] sm:$0xf]
    %v45 = vld [vmem:[%s2 + $0x14] sm:$0xf]
    %v46 = vld [vmem:[%s2 + $0x18] sm:$0xf]
    %v47 = vld [vmem:[%s2 + $0x1c] sm:$0xf]
    %v48 = vld [vmem:[%s2 + $0x20] sm:$0xf]
    %v49 = vld [vmem:[%s2 + $0x24] sm:$0xf]
    %v50 = vld [vmem:[%s2 + $0x28] sm:$0xf]
    %v51 = vld [vmem:[%s2 + $0x2c] sm:$0xf]
    %v52 = vld [vmem:[%s2 + $0x30] sm:$0xf]
    %v53 = vld [vmem:[%s2 + $0x34] sm:$0xf]
    %v54 = vld [vmem:[%s2 + $0x38] sm:$0xf]
    %v55 = vld [vmem:[%s2 + $0x3c] sm:$0xf]
    %v58 = vunpack.c.l.b16 %v38
    %v59 = vunpack.c.l.b16 %v39
    %v60 = vpack.c.b16 %v59, %v58
    %v78 = vunpack.c.l.b16 %v40
    %v79 = vunpack.c.l.b16 %v41
    %v80 = vunpack.c.l.b16 %v42
    %v81 = vunpack.c.l.b16 %v43
    %v82 = vunpack.c.l.b16 %v44
    %v83 = vunpack.c.l.b16 %v45
    %v84 = vunpack.c.l.b16 %v46
    %v85 = vunpack.c.l.b16 %v47
    %v86 = vunpack.c.l.b16 %v48
    %v87 = vunpack.c.l.b16 %v49
    %v88 = vunpack.c.l.b16 %v50
    %v89 = vunpack.c.l.b16 %v51
    %v90 = vunpack.c.l.b16 %v52
    %v91 = vunpack.c.l.b16 %v53
    %v92 = vunpack.c.l.b16 %v54
    %v93 = vunpack.c.l.b16 %v55
    %v94 = vpack.c.b16 %v79, %v78
    %v95 = vpack.c.b16 %v81, %v80
    %v96 = vpack.c.b16 %v83, %v82
    %v97 = vpack.c.b16 %v85, %v84
    %v98 = vpack.c.b16 %v87, %v86
    %v99 = vpack.c.b16 %v89, %v88
    %v100 = vpack.c.b16 %v91, %v90
    %v101 = vpack.c.b16 %v93, %v92
    %110 = vmatprep.subr.bf16.mxu0 0
    %111 = vmatpush1.bf16.msra.mxu0 %v94
    %112 = vmatprep.subr.bf16.mxu0 0
    %113 = vmatpush1.bf16.msra.mxu0 %v95
    %114 = vmatprep.subr.bf16.mxu0 0
    %115 = vmatpush1.bf16.msra.mxu0 %v96
    %116 = vmatprep.subr.bf16.mxu0 0
    %117 = vmatpush1.bf16.msra.mxu0 %v97
    %118 = vmatprep.subr.bf16.mxu0 0
    %119 = vmatpush1.bf16.msra.mxu0 %v98
    %120 = vmatprep.subr.bf16.mxu0 0
    %121 = vmatpush1.bf16.msra.mxu0 %v99
    %122 = vmatprep.subr.bf16.mxu0 0
    %123 = vmatpush1.bf16.msra.mxu0 %v100
    %124 = vmatprep.subr.bf16.mxu0 0
    %125 = vmatpush1.bf16.msra.mxu0 %v101
    %126 = vmatprep.subr.bf16.mxu0 0
    %127 = vmatpush1.bf16.msra.mxu0 0
    %128 = vmatprep.subr.bf16.mxu0 0
    %129 = vmatpush1.bf16.msra.mxu0 0
    %130 = vmatprep.subr.bf16.mxu0 0
    %131 = vmatpush1.bf16.msra.mxu0 0
    %132 = vmatprep.subr.bf16.mxu0 0
    %133 = vmatpush1.bf16.msra.mxu0 0
    %134 = vmatprep.subr.bf16.mxu0 0
    %135 = vmatpush1.bf16.msra.mxu0 0
    %136 = vmatprep.subr.bf16.mxu0 0
    %137 = vmatpush1.bf16.msra.mxu0 0
    %138 = vmatprep.subr.bf16.mxu0 0
    %139 = vmatpush1.bf16.msra.mxu0 0
    %140 = vmatprep.subr.bf16.mxu0 0
    %141 = vmatpush1.bf16.msra.mxu0 0
    %142 = vmatprep.mubr.bf16.mxu0 0
    %143 = vmatmul.mubr.bf16.gmra.mrb[0].mxu0 %v60
    %v144 = vpop.f32.mrb[0].mxu0
    %v145 = vadd.f32 0.0, %v144
    %v146 = vpop.f32.mrb[0].mxu0
    %v147 = vpop.f32.mrb[0].mxu0
    %v148 = vadd.f32 0.0, %v147
    %v149 = vpop.f32.mrb[0].mxu0
    %150 = vdwg.mxu0
    %v151 = vadd.f32 %v36, %v145
    %v152 = vadd.f32 %v37, %v148
    %vm153 = vcmask 261120
    %154 = vst.msk [vmem:[#allocation2] sm:$0xff] %vm153, %v151
    %155 = vst.msk [vmem:[#allocation2 + $0x8] sm:$0xff] %vm153, %v152
    %v156 = vld [vmem:[#allocation3] sm:$0xff]
    %v157 = vld [vmem:[#allocation3 + $0x8] sm:$0xff]
    %v158 = vld [vmem:[%s1] sm:$0xf]
    %v159 = vld [vmem:[%s1 + $0x4] sm:$0xf]
    %v160 = vld [vmem:[%s4] sm:$0xf]
    %v161 = vld [vmem:[%s4 + $0x4] sm:$0xf]
    %v162 = vld [vmem:[%s4 + $0x8] sm:$0xf]
    %v163 = vld [vmem:[%s4 + $0xc] sm:$0xf]
    %v164 = vld [vmem:[%s4 + $0x10] sm:$0xf]
    %v165 = vld [vmem:[%s4 + $0x14] sm:$0xf]
    %v166 = vld [vmem:[%s4 + $0x18] sm:$0xf]
    %v167 = vld [vmem:[%s4 + $0x1c] sm:$0xf]
    %v168 = vld [vmem:[%s4 + $0x20] sm:$0xf]
    %v169 = vld [vmem:[%s4 + $0x24] sm:$0xf]
    %v170 = vld [vmem:[%s4 + $0x28] sm:$0xf]
    %v171 = vld [vmem:[%s4 + $0x2c] sm:$0xf]
    %v172 = vld [vmem:[%s4 + $0x30] sm:$0xf]
    %v173 = vld [vmem:[%s4 + $0x34] sm:$0xf]
    %v174 = vld [vmem:[%s4 + $0x38] sm:$0xf]
    %v175 = vld [vmem:[%s4 + $0x3c] sm:$0xf]
    %v178 = vunpack.c.l.b16 %v158
    %v179 = vunpack.c.l.b16 %v159
    %v180 = vpack.c.b16 %v179, %v178
    %v198 = vunpack.c.l.b16 %v160
    %v199 = vunpack.c.l.b16 %v161
    %v200 = vunpack.c.l.b16 %v162
    %v201 = vunpack.c.l.b16 %v163
    %v202 = vunpack.c.l.b16 %v164
    %v203 = vunpack.c.l.b16 %v165
    %v204 = vunpack.c.l.b16 %v166
    %v205 = vunpack.c.l.b16 %v167
    %v206 = vunpack.c.l.b16 %v168
    %v207 = vunpack.c.l.b16 %v169
    %v208 = vunpack.c.l.b16 %v170
    %v209 = vunpack.c.l.b16 %v171
    %v210 = vunpack.c.l.b16 %v172
    %v211 = vunpack.c.l.b16 %v173
    %v212 = vunpack.c.l.b16 %v174
    %v213 = vunpack.c.l.b16 %v175
    %v214 = vpack.c.b16 %v199, %v198
    %v215 = vpack.c.b16 %v201, %v200
    %v216 = vpack.c.b16 %v203, %v202
    %v217 = vpack.c.b16 %v205, %v204
    %v218 = vpack.c.b16 %v207, %v206
    %v219 = vpack.c.b16 %v209, %v208
    %v220 = vpack.c.b16 %v211, %v210
    %v221 = vpack.c.b16 %v213, %v212
    %230 = vmatprep.subr.bf16.mxu0 0
    %231 = vmatpush1.bf16.msra.mxu0 %v214
    %232 = vmatprep.subr.bf16.mxu0 0
    %233 = vmatpush1.bf16.msra.mxu0 %v215
    %234 = vmatprep.subr.bf16.mxu0 0
    %235 = vmatpush1.bf16.msra.mxu0 %v216
    %236 = vmatprep.subr.bf16.mxu0 0
    %237 = vmatpush1.bf16.msra.mxu0 %v217
    %238 = vmatprep.subr.bf16.mxu0 0
    %239 = vmatpush1.bf16.msra.mxu0 %v218
    %240 = vmatprep.subr.bf16.mxu0 0
    %241 = vmatpush1.bf16.msra.mxu0 %v219
    %242 = vmatprep.subr.bf16.mxu0 0
    %243 = vmatpush1.bf16.msra.mxu0 %v220
    %244 = vmatprep.subr.bf16.mxu0 0
    %245 = vmatpush1.bf16.msra.mxu0 %v221
    %246 = vmatprep.subr.bf16.mxu0 0
    %247 = vmatpush1.bf16.msra.mxu0 0
    %248 = vmatprep.subr.bf16.mxu0 0
    %249 = vmatpush1.bf16.msra.mxu0 0
    %250 = vmatprep.subr.bf16.mxu0 0
    %251 = vmatpush1.bf16.msra.mxu0 0
    %252 = vmatprep.subr.bf16.mxu0 0
    %253 = vmatpush1.bf16.msra.mxu0 0
    %254 = vmatprep.subr.bf16.mxu0 0
    %255 = vmatpush1.bf16.msra.mxu0 0
    %256 = vmatprep.subr.bf16.mxu0 0
    %257 = vmatpush1.bf16.msra.mxu0 0
    %258 = vmatprep.subr.bf16.mxu0 0
    %259 = vmatpush1.bf16.msra.mxu0 0
    %260 = vmatprep.subr.bf16.mxu0 0
    %261 = vmatpush1.bf16.msra.mxu0 0
    %262 = vmatprep.mubr.bf16.mxu0 0
    %263 = vmatmul.mubr.bf16.gmra.mrb[0].mxu0 %v180
    %v264 = vpop.f32.mrb[0].mxu0
    %v265 = vadd.f32 0.0, %v264
    %v266 = vpop.f32.mrb[0].mxu0
    %v267 = vpop.f32.mrb[0].mxu0
    %v268 = vadd.f32 0.0, %v267
    %v269 = vpop.f32.mrb[0].mxu0
    %270 = vdwg.mxu0
    %v271 = vadd.f32 %v156, %v265
    %v272 = vadd.f32 %v157, %v268
    %273 = vst.msk [vmem:[#allocation3] sm:$0xff] %vm153, %v271
    %274 = vst.msk [vmem:[#allocation3 + $0x8] sm:$0xff] %vm153, %v272
    // Predicated region
    $region30: #{tpu_custom_call.1} parent=1 // pred_check
      %p275 = pneg %p27
    $region31: #{tpu_custom_call.1} parent=1 // pred_check_branch
      %277 = sbr.rel (%p275) target = $region33
    $region32: #{tpu_custom_call.1} parent=1 // pred_region
      %v278 = vld [vmem:[#allocation2] sm:$0xff]
      %v279 = vld [vmem:[#allocation2 + $0x8] sm:$0xff]
      %v280 = vld [vmem:[%s3] sm:$0x1]
      %v282 = vlaneseq
      %v283 = vshrl.u32 %v282, 7
      %v284 = vsub.s32 0, %v283
      %v285 = vrot.slane %v280, %v284
      %v287 = vadd.f32 %v278, %v285
      %v288 = vadd.f32 %v279, %v285
      %v289 = vld [vmem:[#allocation3] sm:$0xff]
      %v290 = vld [vmem:[#allocation3 + $0x8] sm:$0xff]
      %v291 = vld [vmem:[%s5] sm:$0x1]
      %v293 = vlaneseq
      %v294 = vshrl.u32 %v293, 7
      %v295 = vsub.s32 0, %v294
      %v296 = vrot.slane %v291, %v295
      %v298 = vadd.f32 %v289, %v296
      %v299 = vadd.f32 %v290, %v296
      %300 = vxpose.xlu0.b32.start [1/16] %v287, 128
      %301 = vxpose.xlu0.b32.cont [2/16] %v288, 128
      %302 = vxpose.xlu0.b32.cont [3/16] 0.0, 128
      %303 = vxpose.xlu0.b32.cont [4/16] 0.0, 128
      %304 = vxpose.xlu0.b32.cont [5/16] 0.0, 128
      %305 = vxpose.xlu0.b32.cont [6/16] 0.0, 128
      %306 = vxpose.xlu0.b32.cont [7/16] 0.0, 128
      %307 = vxpose.xlu0.b32.cont [8/16] 0.0, 128
      %308 = vxpose.xlu0.b32.cont [9/16] 0.0, 128
      %309 = vxpose.xlu0.b32.cont [10/16] 0.0, 128
      %310 = vxpose.xlu0.b32.cont [11/16] 0.0, 128
      %311 = vxpose.xlu0.b32.cont [12/16] 0.0, 128
      %312 = vxpose.xlu0.b32.cont [13/16] 0.0, 128
      %313 = vxpose.xlu0.b32.cont [14/16] 0.0, 128
      %314 = vxpose.xlu0.b32.cont [15/16] 0.0, 128
      %315 = vxpose.xlu0.b32.end [16/16] 0.0, 128
      %v316 = vpop.trf.xlu0
      %v317 = vpop.trf.xlu0
      %v318 = vpop.trf.xlu0
      %v319 = vpop.trf.xlu0
      %v320 = vpop.trf.xlu0
      %v321 = vpop.trf.xlu0
      %v322 = vpop.trf.xlu0
      %v323 = vpop.trf.xlu0
      %v324 = vpop.trf.xlu0
      %v325 = vpop.trf.xlu0
      %v326 = vpop.trf.xlu0
      %v327 = vpop.trf.xlu0
      %v328 = vpop.trf.xlu0
      %v329 = vpop.trf.xlu0
      %v330 = vpop.trf.xlu0
      %v331 = vpop.trf.xlu0
      %v332 = vpack.c.bf16 %v317, %v316
      %v333 = vpack.c.bf16 %v319, %v318
      %v336 = vunpack.c.l.b16 %v332
      %v337 = vunpack.c.h.b16 %v332
      %v338 = vunpack.c.l.b16 %v333
      %v339 = vunpack.c.h.b16 %v333
      %v340 = vpack.c.b16 %v336, %v336
      %v341 = vpack.c.b16 %v337, %v337
      %v342 = vpack.c.b16 %v338, %v338
      %v343 = vpack.c.b16 %v339, %v339
      %vm348 = vcmask 125952
      %349 = vst.msk [vmem:[%s6] sm:$0xf] %vm348, %v340
      %350 = vst.msk [vmem:[%s6 + $0x4] sm:$0xf] %vm348, %v341
      %351 = vst.msk [vmem:[%s6 + $0x8] sm:$0xf] %vm348, %v342
      %352 = vst.msk [vmem:[%s6 + $0xc] sm:$0xf] %vm348, %v343
      %v353 = vpack.c.bf16 %v299, %v298
      %v355 = vunpack.c.l.b16 %v353
      %v356 = vunpack.c.h.b16 %v353
      %v357 = vpack.c.b16 %v355, %v355
      %v358 = vpack.c.b16 %v356, %v356
      %vm361 = vcmask 257024
      %362 = vst.msk [vmem:[#allocation4] sm:$0xf] %vm361, %v357
      %363 = vst.msk [vmem:[#allocation4 + $0x4] sm:$0xf] %vm361, %v358
    $region33: #{tpu_custom_call.1} parent=1 // pred_fallthru
      _
    // Predicated region
    $region34: #{tpu_custom_call.1} parent=1 // pred_check
      _
    $region35: #{tpu_custom_call.1} parent=1 // pred_check_branch
      %365 = sbr.rel (0) target = $region37
    $region36: #{tpu_custom_call.1} parent=1 // pred_region
      _
    $region37: #{tpu_custom_call.1} parent=1 // pred_fallthru
      _
    // Predicated region
    $region38: #{tpu_custom_call.1} parent=1 // pred_check
      _
    $region39: #{tpu_custom_call.1} parent=1 // pred_check_branch
      %367 = sbr.rel (0) target = $region41
    $region40: #{tpu_custom_call.1} parent=1 // pred_region
      %s369 = ssub.s32 128, 128
      %370 = vsyncadd [#allocation5], %s369
      %s371 = sshll.u32 [#allocation4], 4
      %s372 = int_to_ptr.vmem [resolvable:$true] %s371
      %377 = dma.vmem_to_hbm [thread:$0]  %s372, 128, %s7, [#allocation5], 64, 64, 4
    $region41: #{tpu_custom_call.1} parent=1 // pred_fallthru
      _
    // Predicated region
    $region42: #{tpu_custom_call.1} parent=1 // pred_check
      _
    $region43: #{tpu_custom_call.1} parent=1 // pred_check_branch
      %379 = sbr.rel (0) target = $region45
    $region44: #{tpu_custom_call.1} parent=1 // pred_region
      _
    $region45: #{tpu_custom_call.1} parent=1 // pred_fallthru
      _
    // Predicated region
    $region46: #{tpu_custom_call.1} parent=1 // pred_check
      _
    $region47: #{tpu_custom_call.1} parent=1 // pred_check_branch
      %381 = sbr.rel (0) target = $region49
    $region48: #{tpu_custom_call.1} parent=1 // pred_region
      %382 = dma.done [#allocation5], 128
    $region49: #{tpu_custom_call.1} parent=1 // pred_fallthru
      _
    %383 = vsyncpa [#allocation5], 1

</llo_original>
